<compile_context>
chip_gen: v7x
topology: tpu7x:2x2x1
jax: 0.10.0
libtpu: 0.0.40
codegen_flags: <defaults>
</compile_context>

<pallas_src>
import functools

import jax
import jax.numpy as jnp
from jax.experimental import pallas as pl
from jax.experimental.pallas import tpu as pltpu


# ----------------------------- configuration -----------------------------
IN_DIMENSIONS = (32, 32, 64)          # -> total_in_size D = 128 (lane aligned)
D = sum(IN_DIMENSIONS)                # 128
STEPS = 4
BATCH = 8                             # sublane aligned
OUT_DIM = 128                         # output of compression_net


# ------------------------------- the kernel ------------------------------
def _recurrent_fusion_kernel(
    c_fuse_init_ref,                  # (B, D)        f32   ~ torch.rand(batch, D)
    fuse_u_ref,                       # (D, 4D)       bf16  fuse_U weight (transposed)
    fuse_b_ref,                       # (1, 4D)       f32   fuse_W.bias + fuse_U.bias
    comp_w_ref,                       # (STEPS*D, OUT) bf16 compression_net weight
    comp_b_ref,                       # (1, OUT)      f32   compression_net bias
    z_ref,                            # (B, OUT)      f32
    *, steps, d,
):
    f32 = jnp.float32
    bf16 = jnp.bfloat16
    B = c_fuse_init_ref.shape[0]
    out = z_ref.shape[1]

    c_fuse = c_fuse_init_ref[...]
    h_fuse = jnp.zeros((B, d), f32)
    acc = jnp.zeros((B, out), f32)

    for i in range(steps):
        if i == 0:
            # h_fuse == 0 on the first step -> the matmul is exactly the bias.
            sums = jnp.zeros((B, 4 * d), f32) + fuse_b_ref[...]
        else:
            sums = (
                jnp.dot(h_fuse.astype(bf16), fuse_u_ref[...],
                        preferred_element_type=f32)
                + fuse_b_ref[...]
            )

        f_t = jax.nn.sigmoid(sums[:, 0 * d:1 * d])
        i_t = jax.nn.sigmoid(sums[:, 1 * d:2 * d])
        o_t = jax.nn.sigmoid(sums[:, 2 * d:3 * d])
        ch_t = jnp.tanh(sums[:, 3 * d:4 * d])

        c_fuse = f_t * c_fuse + i_t * ch_t
        h_fuse = jnp.tanh(c_fuse) * o_t

        # Accumulate the compression matmul immediately instead of building a
        # (B, steps*D) concat at the end (partial matmul per step, f32 acc).
        acc = acc + jnp.dot(
            h_fuse.astype(bf16),
            comp_w_ref[i * d:(i + 1) * d, :],
            preferred_element_type=f32,
        )

    z_ref[...] = (acc + comp_b_ref[...]).astype(z_ref.dtype)


# ------------------------------ host wrapper ------------------------------
def recurrent_fusion(c_fuse_init, fuse_u, fuse_b, comp_w, comp_b):
    vmem = pl.BlockSpec(memory_space=pltpu.MemorySpace.VMEM)
    kernel = functools.partial(_recurrent_fusion_kernel, steps=STEPS, d=D)
    return pl.pallas_call(
        kernel,
        out_shape=jax.ShapeDtypeStruct((c_fuse_init.shape[0], OUT_DIM), jnp.float32),
        in_specs=[vmem] * 5,
        out_specs=vmem,
    )(c_fuse_init, fuse_u, fuse_b, comp_w, comp_b)


# ------------------------------ parameters --------------------------------
def init_params(key):
    """Deterministic init mimicking PyTorch nn.Linear defaults
    (uniform +/- 1/sqrt(fan_in)).  Weights are stored as
    (in_features, out_features), i.e. transposed vs. PyTorch."""
    def linear_init(k, fan_in, fan_out):
        kw, kb = jax.random.split(k)
        bound = 1.0 / (fan_in ** 0.5)
        w = jax.random.uniform(kw, (fan_in, fan_out), jnp.float32, -bound, bound)
        b = jax.random.uniform(kb, (1, fan_out), jnp.float32, -bound, bound)
        return w, b

    keys = jax.random.split(key, 6)
    mem_w, mem_b = linear_init(keys[0], D, D)
    hlt_w, hlt_wb = linear_init(keys[1], D, 4 * D)
    hlt_u, hlt_ub = linear_init(keys[2], D, 4 * D)
    fuse_w, fuse_wb = linear_init(keys[3], D, 4 * D)
    fuse_u, fuse_ub = linear_init(keys[4], D, 4 * D)
    comp_w, comp_b = linear_init(keys[5], STEPS * D, OUT_DIM)
    return dict(
        mem_w=mem_w, mem_b=mem_b,
        hlt_w=hlt_w, hlt_wb=hlt_wb, hlt_u=hlt_u, hlt_ub=hlt_ub,
        fuse_w=fuse_w, fuse_wb=fuse_wb, fuse_u=fuse_u, fuse_ub=fuse_ub,
        comp_w=comp_w, comp_b=comp_b,
    )


def pack_live_params(params):
    """Fold the provably-dead paths and pre-combine biases on the host.
    Only these tensors are ever shipped to the kernel."""
    fuse_u = params["fuse_u"].astype(jnp.bfloat16)                 # (D, 4D)
    fuse_b = (params["fuse_wb"] + params["fuse_ub"]).astype(jnp.float32)  # (1, 4D)
    comp_w = params["comp_w"].astype(jnp.bfloat16)                 # (STEPS*D, OUT)
    comp_b = params["comp_b"].astype(jnp.float32)                  # (1, OUT)
    return fuse_u, fuse_b, comp_w, comp_b


# -------------------- pure-JAX reference (full fidelity) ------------------
def reference_forward(c_fuse_init, params, steps=STEPS, d=D):
    """Direct transcription of the PyTorch forward, INCLUDING the dead hlt
    recurrence.  The live weights are rounded to bf16 (same quantization the
    kernel uses) so the comparison isolates hardware rounding only."""
    f32 = jnp.float32
    B = c_fuse_init.shape[0]

    def linear(x, w, b):
        return x @ w + b

    model_input = jnp.zeros((B, d), f32)
    c_hlt = linear(model_input, params["mem_w"], params["mem_b"])
    h_hlt = jnp.zeros((B, d), f32)
    inp = model_input
    output_hlt = []
    for _ in range(steps):
        sums = (linear(inp, params["hlt_w"], params["hlt_wb"])
                + linear(h_hlt, params["hlt_u"], params["hlt_ub"]))
        f_t = jax.nn.sigmoid(sums[:, :d])
        i_t = jax.nn.sigmoid(sums[:, d:2 * d])
        o_t = jax.nn.sigmoid(sums[:, 2 * d:3 * d])
        ch_t = jnp.tanh(sums[:, 3 * d:])
        c_hlt = f_t * c_hlt + i_t * ch_t
        h_hlt = jnp.tanh(c_hlt) * o_t
        h_hlt = jax.nn.softmax(h_hlt, axis=1)
        inp = model_input * h_hlt
        output_hlt.append(inp)

    fuse_u = params["fuse_u"].astype(jnp.bfloat16).astype(f32)
    comp_w = params["comp_w"].astype(jnp.bfloat16).astype(f32)

    c_fuse = c_fuse_init
    h_fuse = jnp.zeros((B, d), f32)
    output_fuse = []
    for i in range(steps):
        sums = (linear(output_hlt[i], params["fuse_w"], params["fuse_wb"])
                + linear(h_fuse, fuse_u, params["fuse_ub"]))
        f_t = jax.nn.sigmoid(sums[:, :d])
        i_t = jax.nn.sigmoid(sums[:, d:2 * d])
        o_t = jax.nn.sigmoid(sums[:, 2 * d:3 * d])
        ch_t = jnp.tanh(sums[:, 3 * d:])
        c_fuse = f_t * c_fuse + i_t * ch_t
        h_fuse = jnp.tanh(c_fuse) * o_t
        output_fuse.append(h_fuse)

    fused = jnp.concatenate(output_fuse, axis=1)
    return fused @ comp_w + params["comp_b"]


# ---------------------------------- main -----------------------------------
if __name__ == "__main__":
    root = jax.random.PRNGKey(0)
    k_params, k_modal, k_rand = jax.random.split(root, 3)

    params = init_params(k_params)

    # in_modalities only contribute their batch size in the reference forward;
    # built anyway for shape fidelity.
    in_modalities = [
        jax.random.normal(jax.random.fold_in(k_modal, i), (BATCH, dim), jnp.float32)
        for i, dim in enumerate(IN_DIMENSIONS)
    ]
    batch_size = in_modalities[0].shape[0]

    # Deterministic stand-in for torch.rand(batch_size, total_in_size).
    c_fuse_init = jax.random.uniform(k_rand, (batch_size, D), jnp.float32)

    fuse_u, fuse_b, comp_w, comp_b = pack_live_params(params)
    z = recurrent_fusion(c_fuse_init, fuse_u, fuse_b, comp_w, comp_b)
    jax.block_until_ready(z)

    z_ref = reference_forward(c_fuse_init, params)

    assert z.shape == (BATCH, OUT_DIM) and z.dtype == jnp.float32
    assert bool(jnp.all(jnp.isfinite(z)))
    assert bool(jnp.allclose(z, z_ref, rtol=2e-2, atol=2e-2)), (
        float(jnp.max(jnp.abs(z - z_ref))))
    print("KERNEL_OK")
</pallas_src>

<mosaic_0001>
module attributes {stable_mosaic.version = 11 : i64} {
  func.func @_recurrent_fusion_kernel(%arg0: memref<8x128xf32, #tpu.memory_space<vmem>>, %arg1: memref<128x512xbf16, #tpu.memory_space<vmem>>, %arg2: memref<1x512xf32, #tpu.memory_space<vmem>>, %arg3: memref<512x128xbf16, #tpu.memory_space<vmem>>, %arg4: memref<1x128xf32, #tpu.memory_space<vmem>>, %arg5: memref<8x128xf32, #tpu.memory_space<vmem>>) attributes {dimension_semantics = [], scalar_prefetch = 0 : i64, scratch_operands = 0 : i64, tpu.core_type = #tpu.core_type<tc>} {
    %c0 = arith.constant 0 : index
    %c0_0 = arith.constant 0 : index
    %0 = vector.load %arg0[%c0, %c0_0] : memref<8x128xf32, #tpu.memory_space<vmem>>, vector<8x128xf32>
    %cst = arith.constant 0.000000e+00 : f32
    %1 = vector.broadcast %cst : f32 to vector<8x128xf32>
    %cst_1 = arith.constant 0.000000e+00 : f32
    %2 = vector.broadcast %cst_1 : f32 to vector<8x512xf32>
    %c0_2 = arith.constant 0 : index
    %c0_3 = arith.constant 0 : index
    %3 = vector.load %arg2[%c0_2, %c0_3] : memref<1x512xf32, #tpu.memory_space<vmem>>, vector<1x512xf32>
    %4 = vector.broadcast %3 : vector<1x512xf32> to vector<8x512xf32>
    %5 = arith.addf %2, %4 : vector<8x512xf32>
    %6 = vector.extract_strided_slice %5 {offsets = [0, 0], sizes = [8, 128], strides = [1, 1]} : vector<8x512xf32> to vector<8x128xf32>
    %7 = arith.negf %6 : vector<8x128xf32>
    %8 = math.exp %7 : vector<8x128xf32>
    %cst_4 = arith.constant 1.000000e+00 : f32
    %9 = vector.broadcast %cst_4 : f32 to vector<8x128xf32>
    %10 = arith.addf %9, %8 : vector<8x128xf32>
    %11 = arith.divf %9, %10 : vector<8x128xf32>
    %12 = vector.extract_strided_slice %5 {offsets = [0, 128], sizes = [8, 128], strides = [1, 1]} : vector<8x512xf32> to vector<8x128xf32>
    %13 = arith.negf %12 : vector<8x128xf32>
    %14 = math.exp %13 : vector<8x128xf32>
    %cst_5 = arith.constant 1.000000e+00 : f32
    %15 = vector.broadcast %cst_5 : f32 to vector<8x128xf32>
    %16 = arith.addf %15, %14 : vector<8x128xf32>
    %17 = arith.divf %15, %16 : vector<8x128xf32>
    %18 = vector.extract_strided_slice %5 {offsets = [0, 256], sizes = [8, 128], strides = [1, 1]} : vector<8x512xf32> to vector<8x128xf32>
    %19 = arith.negf %18 : vector<8x128xf32>
    %20 = math.exp %19 : vector<8x128xf32>
    %cst_6 = arith.constant 1.000000e+00 : f32
    %21 = vector.broadcast %cst_6 : f32 to vector<8x128xf32>
    %22 = arith.addf %21, %20 : vector<8x128xf32>
    %23 = arith.divf %21, %22 : vector<8x128xf32>
    %24 = vector.extract_strided_slice %5 {offsets = [0, 384], sizes = [8, 128], strides = [1, 1]} : vector<8x512xf32> to vector<8x128xf32>
    %25 = math.tanh %24 : vector<8x128xf32>
    %26 = arith.mulf %11, %0 : vector<8x128xf32>
    %27 = arith.mulf %17, %25 : vector<8x128xf32>
    %28 = arith.addf %26, %27 : vector<8x128xf32>
    %29 = math.tanh %28 : vector<8x128xf32>
    %30 = arith.mulf %29, %23 : vector<8x128xf32>
    %31 = arith.truncf %30 : vector<8x128xf32> to vector<8x128xbf16>
    %c0_7 = arith.constant 0 : index
    %c0_8 = arith.constant 0 : index
    %32 = vector.load %arg3[%c0_7, %c0_8] : memref<512x128xbf16, #tpu.memory_space<vmem>>, vector<128x128xbf16>
    %cst_9 = arith.constant dense<0.000000e+00> : vector<8x128xf32>
    %33 = tpu.matmul %31, %32, %cst_9 {dimension_numbers = #tpu.dot_dimension_numbers<[1], [0], [0], [1], [0, 0, 1, 1], [], []>} : vector<8x128xbf16>, vector<128x128xbf16>, vector<8x128xf32> -> vector<8x128xf32>
    %34 = arith.addf %1, %33 : vector<8x128xf32>
    %35 = arith.truncf %30 : vector<8x128xf32> to vector<8x128xbf16>
    %c0_10 = arith.constant 0 : index
    %c0_11 = arith.constant 0 : index
    %36 = vector.load %arg1[%c0_10, %c0_11] : memref<128x512xbf16, #tpu.memory_space<vmem>>, vector<128x512xbf16>
    %cst_12 = arith.constant dense<0.000000e+00> : vector<8x512xf32>
    %37 = tpu.matmul %35, %36, %cst_12 {dimension_numbers = #tpu.dot_dimension_numbers<[1], [0], [0], [1], [0, 0, 1, 1], [], []>} : vector<8x128xbf16>, vector<128x512xbf16>, vector<8x512xf32> -> vector<8x512xf32>
    %c0_13 = arith.constant 0 : index
    %c0_14 = arith.constant 0 : index
    %38 = vector.load %arg2[%c0_13, %c0_14] : memref<1x512xf32, #tpu.memory_space<vmem>>, vector<1x512xf32>
    %39 = vector.broadcast %38 : vector<1x512xf32> to vector<8x512xf32>
    %40 = arith.addf %37, %39 : vector<8x512xf32>
    %41 = vector.extract_strided_slice %40 {offsets = [0, 0], sizes = [8, 128], strides = [1, 1]} : vector<8x512xf32> to vector<8x128xf32>
    %42 = arith.negf %41 : vector<8x128xf32>
    %43 = math.exp %42 : vector<8x128xf32>
    %cst_15 = arith.constant 1.000000e+00 : f32
    %44 = vector.broadcast %cst_15 : f32 to vector<8x128xf32>
    %45 = arith.addf %44, %43 : vector<8x128xf32>
    %46 = arith.divf %44, %45 : vector<8x128xf32>
    %47 = vector.extract_strided_slice %40 {offsets = [0, 128], sizes = [8, 128], strides = [1, 1]} : vector<8x512xf32> to vector<8x128xf32>
    %48 = arith.negf %47 : vector<8x128xf32>
    %49 = math.exp %48 : vector<8x128xf32>
    %cst_16 = arith.constant 1.000000e+00 : f32
    %50 = vector.broadcast %cst_16 : f32 to vector<8x128xf32>
    %51 = arith.addf %50, %49 : vector<8x128xf32>
    %52 = arith.divf %50, %51 : vector<8x128xf32>
    %53 = vector.extract_strided_slice %40 {offsets = [0, 256], sizes = [8, 128], strides = [1, 1]} : vector<8x512xf32> to vector<8x128xf32>
    %54 = arith.negf %53 : vector<8x128xf32>
    %55 = math.exp %54 : vector<8x128xf32>
    %cst_17 = arith.constant 1.000000e+00 : f32
    %56 = vector.broadcast %cst_17 : f32 to vector<8x128xf32>
    %57 = arith.addf %56, %55 : vector<8x128xf32>
    %58 = arith.divf %56, %57 : vector<8x128xf32>
    %59 = vector.extract_strided_slice %40 {offsets = [0, 384], sizes = [8, 128], strides = [1, 1]} : vector<8x512xf32> to vector<8x128xf32>
    %60 = math.tanh %59 : vector<8x128xf32>
    %61 = arith.mulf %46, %28 : vector<8x128xf32>
    %62 = arith.mulf %52, %60 : vector<8x128xf32>
    %63 = arith.addf %61, %62 : vector<8x128xf32>
    %64 = math.tanh %63 : vector<8x128xf32>
    %65 = arith.mulf %64, %58 : vector<8x128xf32>
    %66 = arith.truncf %65 : vector<8x128xf32> to vector<8x128xbf16>
    %c128 = arith.constant 128 : index
    %c0_18 = arith.constant 0 : index
    %67 = vector.load %arg3[%c128, %c0_18] : memref<512x128xbf16, #tpu.memory_space<vmem>>, vector<128x128xbf16>
    %cst_19 = arith.constant dense<0.000000e+00> : vector<8x128xf32>
    %68 = tpu.matmul %66, %67, %cst_19 {dimension_numbers = #tpu.dot_dimension_numbers<[1], [0], [0], [1], [0, 0, 1, 1], [], []>} : vector<8x128xbf16>, vector<128x128xbf16>, vector<8x128xf32> -> vector<8x128xf32>
    %69 = arith.addf %34, %68 : vector<8x128xf32>
    %70 = arith.truncf %65 : vector<8x128xf32> to vector<8x128xbf16>
    %c0_20 = arith.constant 0 : index
    %c0_21 = arith.constant 0 : index
    %71 = vector.load %arg1[%c0_20, %c0_21] : memref<128x512xbf16, #tpu.memory_space<vmem>>, vector<128x512xbf16>
    %cst_22 = arith.constant dense<0.000000e+00> : vector<8x512xf32>
    %72 = tpu.matmul %70, %71, %cst_22 {dimension_numbers = #tpu.dot_dimension_numbers<[1], [0], [0], [1], [0, 0, 1, 1], [], []>} : vector<8x128xbf16>, vector<128x512xbf16>, vector<8x512xf32> -> vector<8x512xf32>
    %c0_23 = arith.constant 0 : index
    %c0_24 = arith.constant 0 : index
    %73 = vector.load %arg2[%c0_23, %c0_24] : memref<1x512xf32, #tpu.memory_space<vmem>>, vector<1x512xf32>
    %74 = vector.broadcast %73 : vector<1x512xf32> to vector<8x512xf32>
    %75 = arith.addf %72, %74 : vector<8x512xf32>
    %76 = vector.extract_strided_slice %75 {offsets = [0, 0], sizes = [8, 128], strides = [1, 1]} : vector<8x512xf32> to vector<8x128xf32>
    %77 = arith.negf %76 : vector<8x128xf32>
    %78 = math.exp %77 : vector<8x128xf32>
    %cst_25 = arith.constant 1.000000e+00 : f32
    %79 = vector.broadcast %cst_25 : f32 to vector<8x128xf32>
    %80 = arith.addf %79, %78 : vector<8x128xf32>
    %81 = arith.divf %79, %80 : vector<8x128xf32>
    %82 = vector.extract_strided_slice %75 {offsets = [0, 128], sizes = [8, 128], strides = [1, 1]} : vector<8x512xf32> to vector<8x128xf32>
    %83 = arith.negf %82 : vector<8x128xf32>
    %84 = math.exp %83 : vector<8x128xf32>
    %cst_26 = arith.constant 1.000000e+00 : f32
    %85 = vector.broadcast %cst_26 : f32 to vector<8x128xf32>
    %86 = arith.addf %85, %84 : vector<8x128xf32>
    %87 = arith.divf %85, %86 : vector<8x128xf32>
    %88 = vector.extract_strided_slice %75 {offsets = [0, 256], sizes = [8, 128], strides = [1, 1]} : vector<8x512xf32> to vector<8x128xf32>
    %89 = arith.negf %88 : vector<8x128xf32>
    %90 = math.exp %89 : vector<8x128xf32>
    %cst_27 = arith.constant 1.000000e+00 : f32
    %91 = vector.broadcast %cst_27 : f32 to vector<8x128xf32>
    %92 = arith.addf %91, %90 : vector<8x128xf32>
    %93 = arith.divf %91, %92 : vector<8x128xf32>
    %94 = vector.extract_strided_slice %75 {offsets = [0, 384], sizes = [8, 128], strides = [1, 1]} : vector<8x512xf32> to vector<8x128xf32>
    %95 = math.tanh %94 : vector<8x128xf32>
    %96 = arith.mulf %81, %63 : vector<8x128xf32>
    %97 = arith.mulf %87, %95 : vector<8x128xf32>
    %98 = arith.addf %96, %97 : vector<8x128xf32>
    %99 = math.tanh %98 : vector<8x128xf32>
    %100 = arith.mulf %99, %93 : vector<8x128xf32>
    %101 = arith.truncf %100 : vector<8x128xf32> to vector<8x128xbf16>
    %c256 = arith.constant 256 : index
    %c0_28 = arith.constant 0 : index
    %102 = vector.load %arg3[%c256, %c0_28] : memref<512x128xbf16, #tpu.memory_space<vmem>>, vector<128x128xbf16>
    %cst_29 = arith.constant dense<0.000000e+00> : vector<8x128xf32>
    %103 = tpu.matmul %101, %102, %cst_29 {dimension_numbers = #tpu.dot_dimension_numbers<[1], [0], [0], [1], [0, 0, 1, 1], [], []>} : vector<8x128xbf16>, vector<128x128xbf16>, vector<8x128xf32> -> vector<8x128xf32>
    %104 = arith.addf %69, %103 : vector<8x128xf32>
    %105 = arith.truncf %100 : vector<8x128xf32> to vector<8x128xbf16>
    %c0_30 = arith.constant 0 : index
    %c0_31 = arith.constant 0 : index
    %106 = vector.load %arg1[%c0_30, %c0_31] : memref<128x512xbf16, #tpu.memory_space<vmem>>, vector<128x512xbf16>
    %cst_32 = arith.constant dense<0.000000e+00> : vector<8x512xf32>
    %107 = tpu.matmul %105, %106, %cst_32 {dimension_numbers = #tpu.dot_dimension_numbers<[1], [0], [0], [1], [0, 0, 1, 1], [], []>} : vector<8x128xbf16>, vector<128x512xbf16>, vector<8x512xf32> -> vector<8x512xf32>
    %c0_33 = arith.constant 0 : index
    %c0_34 = arith.constant 0 : index
    %108 = vector.load %arg2[%c0_33, %c0_34] : memref<1x512xf32, #tpu.memory_space<vmem>>, vector<1x512xf32>
    %109 = vector.broadcast %108 : vector<1x512xf32> to vector<8x512xf32>
    %110 = arith.addf %107, %109 : vector<8x512xf32>
    %111 = vector.extract_strided_slice %110 {offsets = [0, 0], sizes = [8, 128], strides = [1, 1]} : vector<8x512xf32> to vector<8x128xf32>
    %112 = arith.negf %111 : vector<8x128xf32>
    %113 = math.exp %112 : vector<8x128xf32>
    %cst_35 = arith.constant 1.000000e+00 : f32
    %114 = vector.broadcast %cst_35 : f32 to vector<8x128xf32>
    %115 = arith.addf %114, %113 : vector<8x128xf32>
    %116 = arith.divf %114, %115 : vector<8x128xf32>
    %117 = vector.extract_strided_slice %110 {offsets = [0, 128], sizes = [8, 128], strides = [1, 1]} : vector<8x512xf32> to vector<8x128xf32>
    %118 = arith.negf %117 : vector<8x128xf32>
    %119 = math.exp %118 : vector<8x128xf32>
    %cst_36 = arith.constant 1.000000e+00 : f32
    %120 = vector.broadcast %cst_36 : f32 to vector<8x128xf32>
    %121 = arith.addf %120, %119 : vector<8x128xf32>
    %122 = arith.divf %120, %121 : vector<8x128xf32>
    %123 = vector.extract_strided_slice %110 {offsets = [0, 256], sizes = [8, 128], strides = [1, 1]} : vector<8x512xf32> to vector<8x128xf32>
    %124 = arith.negf %123 : vector<8x128xf32>
    %125 = math.exp %124 : vector<8x128xf32>
    %cst_37 = arith.constant 1.000000e+00 : f32
    %126 = vector.broadcast %cst_37 : f32 to vector<8x128xf32>
    %127 = arith.addf %126, %125 : vector<8x128xf32>
    %128 = arith.divf %126, %127 : vector<8x128xf32>
    %129 = vector.extract_strided_slice %110 {offsets = [0, 384], sizes = [8, 128], strides = [1, 1]} : vector<8x512xf32> to vector<8x128xf32>
    %130 = math.tanh %129 : vector<8x128xf32>
    %131 = arith.mulf %116, %98 : vector<8x128xf32>
    %132 = arith.mulf %122, %130 : vector<8x128xf32>
    %133 = arith.addf %131, %132 : vector<8x128xf32>
    %134 = math.tanh %133 : vector<8x128xf32>
    %135 = arith.mulf %134, %128 : vector<8x128xf32>
    %136 = arith.truncf %135 : vector<8x128xf32> to vector<8x128xbf16>
    %c384 = arith.constant 384 : index
    %c0_38 = arith.constant 0 : index
    %137 = vector.load %arg3[%c384, %c0_38] : memref<512x128xbf16, #tpu.memory_space<vmem>>, vector<128x128xbf16>
    %cst_39 = arith.constant dense<0.000000e+00> : vector<8x128xf32>
    %138 = tpu.matmul %136, %137, %cst_39 {dimension_numbers = #tpu.dot_dimension_numbers<[1], [0], [0], [1], [0, 0, 1, 1], [], []>} : vector<8x128xbf16>, vector<128x128xbf16>, vector<8x128xf32> -> vector<8x128xf32>
    %139 = arith.addf %104, %138 : vector<8x128xf32>
    %c0_40 = arith.constant 0 : index
    %c0_41 = arith.constant 0 : index
    %140 = vector.load %arg4[%c0_40, %c0_41] : memref<1x128xf32, #tpu.memory_space<vmem>>, vector<1x128xf32>
    %141 = vector.broadcast %140 : vector<1x128xf32> to vector<8x128xf32>
    %142 = arith.addf %139, %141 : vector<8x128xf32>
    %c0_42 = arith.constant 0 : index
    %c0_43 = arith.constant 0 : index
    %143 = vector.load %arg5[%c0_42, %c0_43] : memref<8x128xf32, #tpu.memory_space<vmem>>, vector<8x128xf32>
    tpu.vector_store %arg5[%c0_42, %c0_43], %142 {strides = array<i32>} : memref<8x128xf32, #tpu.memory_space<vmem>>, vector<8x128xf32>,
    return
  }
}

</mosaic_0001>

<llo_original>
// kernel: tpu_custom_call.1
$region0: #{tpu_custom_call.1}
  #allocation0 [shape = 'u32[]', space=smem, size = 0x4, offset = 0x4, fixed_abs, tag = 'smem constant byte address 0x4 - core index']
  #allocation1 [shape = 'u32[144,128]{1,0:T(1,128)}', space=vmem, size = 0x12000, scoped, tag = 'internal scratch']
  %s0 = inlined_call_operand.hbm [shape: f32[8,128], index: 0, kind: input, shape index: {}]
  %s1 = inlined_call_operand.hbm [shape: bf16[128,512], index: 1, kind: input, shape index: {}]
  %s2 = inlined_call_operand.vmem [shape: f32[1,512], index: 2, kind: input, shape index: {}]
  %s3 = inlined_call_operand.hbm [shape: bf16[512,128], index: 3, kind: input, shape index: {}]
  %s4 = inlined_call_operand.vmem [shape: f32[1,128], index: 4, kind: input, shape index: {}]
  %s5 = inlined_call_operand.hbm [shape: f32[8,128], index: 5, kind: output, shape index: {}]
  %s6 = sld [smem:[#allocation0]]
  $region42: #{tpu_custom_call.1} parent=0
    _
  %s8 = ssub.s32 1, %s6
  %s9 = scalar_select 0, %s8, %s6
  $region1: #{tpu_custom_call.1} parent=0
    #allocation2 [shape = 'u8[4096]{0}', space=vmem, size = 0x1000, scoped, tag = 'input window, operand 0, single buffered']
    #allocation3 [shape = 's32[1]{0}', space=sflag, size = 0x4, scoped, tag = 'scoped memory for tpu_custom_call.1']
    #allocation4 [shape = 's32[1]{0}', space=sflag, size = 0x4, scoped, tag = 'scoped memory for tpu_custom_call.1']
    #allocation5 [shape = 'u8[131072]{0}', space=vmem, size = 0x20000, scoped, tag = 'input window, operand 1, single buffered']
    #allocation6 [shape = 's32[1]{0}', space=sflag, size = 0x4, scoped, tag = 'scoped memory for tpu_custom_call.1']
    #allocation7 [shape = 'u8[131072]{0}', space=vmem, size = 0x20000, scoped, tag = 'input window, operand 3, single buffered']
    #allocation8 [shape = 'u8[4096]{0}', space=vmem, size = 0x1000, scoped, tag = 'output window, operand 0, single buffered']
    %10 = vsyncpa [#allocation3], 0
    %11 = vsyncpa [#allocation6], 0
    %12 = vsyncpa [#allocation4], 0
    // Predicated region
    $region2: #{tpu_custom_call.1} parent=1 // pred_check
      _
    $region3: #{tpu_custom_call.1} parent=1 // pred_check_branch
      %14 = sbr.rel (0) target = $region5
    $region4: #{tpu_custom_call.1} parent=1 // pred_region
      %s16 = ssub.s32 128, 128
      %17 = vsyncadd [#allocation3], %s16
      %s19 = sshll.u32 [#allocation2], 4
      %s20 = int_to_ptr.vmem [resolvable:$true] %s19
      %22 = dma.hbm_to_vmem [thread:$0]  %s0, 128, %s20, [#allocation3]
    $region5: #{tpu_custom_call.1} parent=1 // pred_fallthru
      _
    // Predicated region
    $region6: #{tpu_custom_call.1} parent=1 // pred_check
      _
    $region7: #{tpu_custom_call.1} parent=1 // pred_check_branch
      %24 = sbr.rel (0) target = $region9
    $region8: #{tpu_custom_call.1} parent=1 // pred_region
      %s26 = ssub.s32 4096, 4096
      %27 = vsyncadd [#allocation6], %s26
      %s28 = sshll.u32 [#allocation5], 4
      %s29 = int_to_ptr.vmem [resolvable:$true] %s28
      %34 = dma.hbm_to_vmem [thread:$0]  %s1, 4096, %s29, [#allocation6], 256, 256, 16
    $region9: #{tpu_custom_call.1} parent=1 // pred_fallthru
      _
    // Predicated region
    $region10: #{tpu_custom_call.1} parent=1 // pred_check
      _
    $region11: #{tpu_custom_call.1} parent=1 // pred_check_branch
      %36 = sbr.rel (0) target = $region13
    $region12: #{tpu_custom_call.1} parent=1 // pred_region
      _
    $region13: #{tpu_custom_call.1} parent=1 // pred_fallthru
      _
    // Predicated region
    $region14: #{tpu_custom_call.1} parent=1 // pred_check
      _
    $region15: #{tpu_custom_call.1} parent=1 // pred_check_branch
      %38 = sbr.rel (0) target = $region17
    $region16: #{tpu_custom_call.1} parent=1 // pred_region
      %s40 = ssub.s32 4096, 4096
      %41 = vsyncadd [#allocation6], %s40
      %s42 = sshll.u32 [#allocation7], 4
      %s43 = int_to_ptr.vmem [resolvable:$true] %s42
      %48 = dma.hbm_to_vmem [thread:$0]  %s3, 4096, %s43, [#allocation6], 64, 64, 4
    $region17: #{tpu_custom_call.1} parent=1 // pred_fallthru
      _
    // Predicated region
    $region18: #{tpu_custom_call.1} parent=1 // pred_check
      _
    $region19: #{tpu_custom_call.1} parent=1 // pred_check_branch
      %50 = sbr.rel (0) target = $region21
    $region20: #{tpu_custom_call.1} parent=1 // pred_region
      _
    $region21: #{tpu_custom_call.1} parent=1 // pred_fallthru
      _
    // Predicated region
    $region22: #{tpu_custom_call.1} parent=1 // pred_check
      _
    $region23: #{tpu_custom_call.1} parent=1 // pred_check_branch
      %52 = sbr.rel (0) target = $region25
    $region24: #{tpu_custom_call.1} parent=1 // pred_region
      %53 = dma.done [#allocation3], 128
    $region25: #{tpu_custom_call.1} parent=1 // pred_fallthru
      _
    // Predicated region
    $region26: #{tpu_custom_call.1} parent=1 // pred_check
      _
    $region27: #{tpu_custom_call.1} parent=1 // pred_check_branch
      %55 = sbr.rel (0) target = $region29
    $region28: #{tpu_custom_call.1} parent=1 // pred_region
      %56 = dma.done [#allocation6], 4096
    $region29: #{tpu_custom_call.1} parent=1 // pred_fallthru
      _
    // Predicated region
    $region30: #{tpu_custom_call.1} parent=1 // pred_check
      _
    $region31: #{tpu_custom_call.1} parent=1 // pred_check_branch
      %58 = sbr.rel (0) target = $region33
    $region32: #{tpu_custom_call.1} parent=1 // pred_region
      %59 = dma.done [#allocation6], 4096
    $region33: #{tpu_custom_call.1} parent=1 // pred_fallthru
      _
    %v61 = vld [vmem:[#allocation2] sm:$0xff]
    %v62 = vld [vmem:[%s2] sm:$0xf]
    %v64 = vlaneseq
    %v65 = vshrl.u32 %v64, 7
    %v66 = vsub.s32 0, %v65
    %v67 = vrot.slane %v62, %v66
    %v68 = vlaneseq
    %v69 = vshrl.u32 %v68, 7
    %v70 = vsub.s32 1, %v69
    %v71 = vrot.slane %v62, %v70
    %v72 = vlaneseq
    %v73 = vshrl.u32 %v72, 7
    %v74 = vsub.s32 2, %v73
    %v75 = vrot.slane %v62, %v74
    %v76 = vlaneseq
    %v77 = vshrl.u32 %v76, 7
    %v78 = vsub.s32 3, %v77
    %v79 = vrot.slane %v62, %v78
    %v84 = vadd.f32 %v67, 0.0
    %v85 = vadd.f32 %v71, 0.0
    %v86 = vadd.f32 %v75, 0.0
    %v87 = vadd.f32 %v79, 0.0
    %v88 = vxor.u32 %v84, 2147483648
    %v89 = vmul.f32 %v88, 1.442695
    %v90 = vpow.pop %v89
    %v91 = vadd.f32 %v90, 1.0
    %v92 = vrcp.pop %v91
    %v93 = vmul.f32 1.0, %v92
    %v94 = vxor.u32 %v85, 2147483648
    %v95 = vmul.f32 %v94, 1.442695
    %v96 = vpow.pop %v95
    %v97 = vadd.f32 %v96, 1.0
    %v98 = vrcp.pop %v97
    %v99 = vmul.f32 1.0, %v98
    %v100 = vxor.u32 %v86, 2147483648
    %v101 = vmul.f32 %v100, 1.442695
    %v102 = vpow.pop %v101
    %v103 = vadd.f32 %v102, 1.0
    %v104 = vrcp.pop %v103
    %v105 = vmul.f32 1.0, %v104
    %v106 = vtanh.pop %v87
    %v107 = vmul.f32 %v93, %v61
    %v108 = vmul.f32 %v99, %v106
    %v109 = vadd.f32 %v107, %v108
    %v110 = vtanh.pop %v109
    %v111 = vmul.f32 %v110, %v105
    %v112 = vpack.c.bf16 %v111, %v111
    %v113 = vld [vmem:[#allocation7] sm:$0xf]
    %v114 = vld [vmem:[#allocation7 + $0x4] sm:$0xf]
    %v115 = vld [vmem:[#allocation7 + $0x8] sm:$0xf]
    %v116 = vld [vmem:[#allocation7 + $0xc] sm:$0xf]
    %v117 = vld [vmem:[#allocation7 + $0x10] sm:$0xf]
    %v118 = vld [vmem:[#allocation7 + $0x14] sm:$0xf]
    %v119 = vld [vmem:[#allocation7 + $0x18] sm:$0xf]
    %v120 = vld [vmem:[#allocation7 + $0x1c] sm:$0xf]
    %v121 = vld [vmem:[#allocation7 + $0x20] sm:$0xf]
    %v122 = vld [vmem:[#allocation7 + $0x24] sm:$0xf]
    %v123 = vld [vmem:[#allocation7 + $0x28] sm:$0xf]
    %v124 = vld [vmem:[#allocation7 + $0x2c] sm:$0xf]
    %v125 = vld [vmem:[#allocation7 + $0x30] sm:$0xf]
    %v126 = vld [vmem:[#allocation7 + $0x34] sm:$0xf]
    %v127 = vld [vmem:[#allocation7 + $0x38] sm:$0xf]
    %v128 = vld [vmem:[#allocation7 + $0x3c] sm:$0xf]
    %v129 = vld [vmem:[#allocation5] sm:$0xff]
    %v130 = vld [vmem:[#allocation5 + $0x8] sm:$0xff]
    %v131 = vld [vmem:[#allocation5 + $0x10] sm:$0xff]
    %v132 = vld [vmem:[#allocation5 + $0x18] sm:$0xff]
    %v133 = vld [vmem:[#allocation5 + $0x20] sm:$0xff]
    %v134 = vld [vmem:[#allocation5 + $0x28] sm:$0xff]
    %v135 = vld [vmem:[#allocation5 + $0x30] sm:$0xff]
    %v136 = vld [vmem:[#allocation5 + $0x38] sm:$0xff]
    %v137 = vld [vmem:[#allocation5 + $0x40] sm:$0xff]
    %v138 = vld [vmem:[#allocation5 + $0x48] sm:$0xff]
    %v139 = vld [vmem:[#allocation5 + $0x50] sm:$0xff]
    %v140 = vld [vmem:[#allocation5 + $0x58] sm:$0xff]
    %v141 = vld [vmem:[#allocation5 + $0x60] sm:$0xff]
    %v142 = vld [vmem:[#allocation5 + $0x68] sm:$0xff]
    %v143 = vld [vmem:[#allocation5 + $0x70] sm:$0xff]
    %v144 = vld [vmem:[#allocation5 + $0x78] sm:$0xff]
    %v145 = vld [vmem:[#allocation5 + $0x80] sm:$0xff]
    %v146 = vld [vmem:[#allocation5 + $0x88] sm:$0xff]
    %v147 = vld [vmem:[#allocation5 + $0x90] sm:$0xff]
    %v148 = vld [vmem:[#allocation5 + $0x98] sm:$0xff]
    %v149 = vld [vmem:[#allocation5 + $0xa0] sm:$0xff]
    %v150 = vld [vmem:[#allocation5 + $0xa8] sm:$0xff]
    %v151 = vld [vmem:[#allocation5 + $0xb0] sm:$0xff]
    %v152 = vld [vmem:[#allocation5 + $0xb8] sm:$0xff]
    %v153 = vld [vmem:[#allocation5 + $0xc0] sm:$0xff]
    %v154 = vld [vmem:[#allocation5 + $0xc8] sm:$0xff]
    %v155 = vld [vmem:[#allocation5 + $0xd0] sm:$0xff]
    %v156 = vld [vmem:[#allocation5 + $0xd8] sm:$0xff]
    %v157 = vld [vmem:[#allocation5 + $0xe0] sm:$0xff]
    %v158 = vld [vmem:[#allocation5 + $0xe8] sm:$0xff]
    %v159 = vld [vmem:[#allocation5 + $0xf0] sm:$0xff]
    %v160 = vld [vmem:[#allocation5 + $0xf8] sm:$0xff]
    %v193 = vunpack.c.l.b16 %v129
    %v194 = vunpack.c.h.b16 %v129
    %v195 = vunpack.c.l.b16 %v130
    %v196 = vunpack.c.h.b16 %v130
    %v197 = vunpack.c.l.b16 %v131
    %v198 = vunpack.c.h.b16 %v131
    %v199 = vunpack.c.l.b16 %v132
    %v200 = vunpack.c.h.b16 %v132
    %v201 = vunpack.c.l.b16 %v133
    %v202 = vunpack.c.h.b16 %v133
    %v203 = vunpack.c.l.b16 %v134
    %v204 = vunpack.c.h.b16 %v134
    %v205 = vunpack.c.l.b16 %v135
    %v206 = vunpack.c.h.b16 %v135
    %v207 = vunpack.c.l.b16 %v136
    %v208 = vunpack.c.h.b16 %v136
    %v209 = vunpack.c.l.b16 %v137
    %v210 = vunpack.c.h.b16 %v137
    %v211 = vunpack.c.l.b16 %v138
    %v212 = vunpack.c.h.b16 %v138
    %v213 = vunpack.c.l.b16 %v139
    %v214 = vunpack.c.h.b16 %v139
    %v215 = vunpack.c.l.b16 %v140
    %v216 = vunpack.c.h.b16 %v140
    %v217 = vunpack.c.l.b16 %v141
    %v218 = vunpack.c.h.b16 %v141
    %v219 = vunpack.c.l.b16 %v142
    %v220 = vunpack.c.h.b16 %v142
    %v221 = vunpack.c.l.b16 %v143
    %v222 = vunpack.c.h.b16 %v143
    %v223 = vunpack.c.l.b16 %v144
    %v224 = vunpack.c.h.b16 %v144
    %v225 = vunpack.c.l.b16 %v145
    %v226 = vunpack.c.h.b16 %v145
    %v227 = vunpack.c.l.b16 %v146
    %v228 = vunpack.c.h.b16 %v146
    %v229 = vunpack.c.l.b16 %v147
    %v230 = vunpack.c.h.b16 %v147
    %v231 = vunpack.c.l.b16 %v148
    %v232 = vunpack.c.h.b16 %v148
    %v233 = vunpack.c.l.b16 %v149
    %v234 = vunpack.c.h.b16 %v149
    %v235 = vunpack.c.l.b16 %v150
    %v236 = vunpack.c.h.b16 %v150
    %v237 = vunpack.c.l.b16 %v151
    %v238 = vunpack.c.h.b16 %v151
    %v239 = vunpack.c.l.b16 %v152
    %v240 = vunpack.c.h.b16 %v152
    %v241 = vunpack.c.l.b16 %v153
    %v242 = vunpack.c.h.b16 %v153
    %v243 = vunpack.c.l.b16 %v154
    %v244 = vunpack.c.h.b16 %v154
    %v245 = vunpack.c.l.b16 %v155
    %v246 = vunpack.c.h.b16 %v155
    %v247 = vunpack.c.l.b16 %v156
    %v248 = vunpack.c.h.b16 %v156
    %v249 = vunpack.c.l.b16 %v157
    %v250 = vunpack.c.h.b16 %v157
    %v251 = vunpack.c.l.b16 %v158
    %v252 = vunpack.c.h.b16 %v158
    %v253 = vunpack.c.l.b16 %v159
    %v254 = vunpack.c.h.b16 %v159
    %v255 = vunpack.c.l.b16 %v160
    %v256 = vunpack.c.h.b16 %v160
    %v257 = vpack.c.b16 %v197, %v193
    %v258 = vpack.c.b16 %v198, %v194
    %v259 = vpack.c.b16 %v199, %v195
    %v260 = vpack.c.b16 %v200, %v196
    %v261 = vpack.c.b16 %v205, %v201
    %v262 = vpack.c.b16 %v206, %v202
    %v263 = vpack.c.b16 %v207, %v203
    %v264 = vpack.c.b16 %v208, %v204
    %v265 = vpack.c.b16 %v213, %v209
    %v266 = vpack.c.b16 %v214, %v210
    %v267 = vpack.c.b16 %v215, %v211
    %v268 = vpack.c.b16 %v216, %v212
    %v269 = vpack.c.b16 %v221, %v217
    %v270 = vpack.c.b16 %v222, %v218
    %v271 = vpack.c.b16 %v223, %v219
    %v272 = vpack.c.b16 %v224, %v220
    %v273 = vpack.c.b16 %v229, %v225
    %v274 = vpack.c.b16 %v230, %v226
    %v275 = vpack.c.b16 %v231, %v227
    %v276 = vpack.c.b16 %v232, %v228
    %v277 = vpack.c.b16 %v237, %v233
    %v278 = vpack.c.b16 %v238, %v234
    %v279 = vpack.c.b16 %v239, %v235
    %v280 = vpack.c.b16 %v240, %v236
    %v281 = vpack.c.b16 %v245, %v241
    %v282 = vpack.c.b16 %v246, %v242
    %v283 = vpack.c.b16 %v247, %v243
    %v284 = vpack.c.b16 %v248, %v244
    %v285 = vpack.c.b16 %v253, %v249
    %v286 = vpack.c.b16 %v254, %v250
    %v287 = vpack.c.b16 %v255, %v251
    %v288 = vpack.c.b16 %v256, %v252
    %321 = vmatprep.subr.bf16.mxu0 %v258
    %322 = vmatpush1.bf16.msra.mxu0 %v257
    %323 = vmatprep.subr.bf16.mxu0 %v262
    %324 = vmatpush1.bf16.msra.mxu0 %v261
    %325 = vmatprep.subr.bf16.mxu0 %v266
    %326 = vmatpush1.bf16.msra.mxu0 %v265
    %327 = vmatprep.subr.bf16.mxu0 %v270
    %328 = vmatpush1.bf16.msra.mxu0 %v269
    %329 = vmatprep.subr.bf16.mxu0 %v274
    %330 = vmatpush1.bf16.msra.mxu0 %v273
    %331 = vmatprep.subr.bf16.mxu0 %v278
    %332 = vmatpush1.bf16.msra.mxu0 %v277
    %333 = vmatprep.subr.bf16.mxu0 %v282
    %334 = vmatpush1.bf16.msra.mxu0 %v281
    %335 = vmatprep.subr.bf16.mxu0 %v286
    %336 = vmatpush1.bf16.msra.mxu0 %v285
    %337 = vmatprep.subr.bf16.mxu0 0
    %338 = vmatpush1.bf16.msra.mxu0 0
    %339 = vmatprep.subr.bf16.mxu0 0
    %340 = vmatpush1.bf16.msra.mxu0 0
    %341 = vmatprep.subr.bf16.mxu0 0
    %342 = vmatpush1.bf16.msra.mxu0 0
    %343 = vmatprep.subr.bf16.mxu0 0
    %344 = vmatpush1.bf16.msra.mxu0 0
    %345 = vmatprep.subr.bf16.mxu0 0
    %346 = vmatpush1.bf16.msra.mxu0 0
    %347 = vmatprep.subr.bf16.mxu0 0
    %348 = vmatpush1.bf16.msra.mxu0 0
    %349 = vmatprep.subr.bf16.mxu0 0
    %350 = vmatpush1.bf16.msra.mxu0 0
    %351 = vmatprep.subr.bf16.mxu0 0
    %352 = vmatpush1.bf16.msra.mxu0 0
    %353 = vmatprep.mubr.bf16.mxu0 0
    %354 = vmatmul.mubr.bf16.gmra.mrb[0].mxu0 %v112
    %v355 = vpop.f32.mrb[0].mxu0
    %v356 = vadd.f32 %v67, %v355
    %v357 = vpop.f32.mrb[0].mxu0
    %v358 = vadd.f32 %v71, %v357
    %v359 = vpop.f32.mrb[0].mxu0
    %v360 = vpop.f32.mrb[0].mxu0
    %361 = vdwg.mxu0
    %362 = vmatprep.subr.bf16.mxu0 %v260
    %363 = vmatpush1.bf16.msra.mxu0 %v259
    %364 = vmatprep.subr.bf16.mxu0 %v264
    %365 = vmatpush1.bf16.msra.mxu0 %v263
    %366 = vmatprep.subr.bf16.mxu0 %v268
    %367 = vmatpush1.bf16.msra.mxu0 %v267
    %368 = vmatprep.subr.bf16.mxu0 %v272
    %369 = vmatpush1.bf16.msra.mxu0 %v271
    %370 = vmatprep.subr.bf16.mxu0 %v276
    %371 = vmatpush1.bf16.msra.mxu0 %v275
    %372 = vmatprep.subr.bf16.mxu0 %v280
    %373 = vmatpush1.bf16.msra.mxu0 %v279
    %374 = vmatprep.subr.bf16.mxu0 %v284
    %375 = vmatpush1.bf16.msra.mxu0 %v283
    %376 = vmatprep.subr.bf16.mxu0 %v288
    %377 = vmatpush1.bf16.msra.mxu0 %v287
    %378 = vmatprep.subr.bf16.mxu0 0
    %379 = vmatpush1.bf16.msra.mxu0 0
    %380 = vmatprep.subr.bf16.mxu0 0
    %381 = vmatpush1.bf16.msra.mxu0 0
    %382 = vmatprep.subr.bf16.mxu0 0
    %383 = vmatpush1.bf16.msra.mxu0 0
    %384 = vmatprep.subr.bf16.mxu0 0
    %385 = vmatpush1.bf16.msra.mxu0 0
    %386 = vmatprep.subr.bf16.mxu0 0
    %387 = vmatpush1.bf16.msra.mxu0 0
    %388 = vmatprep.subr.bf16.mxu0 0
    %389 = vmatpush1.bf16.msra.mxu0 0
    %390 = vmatprep.subr.bf16.mxu0 0
    %391 = vmatpush1.bf16.msra.mxu0 0
    %392 = vmatprep.subr.bf16.mxu0 0
    %393 = vmatpush1.bf16.msra.mxu0 0
    %394 = vmatprep.mubr.bf16.mxu0 0
    %395 = vmatmul.mubr.bf16.gmra.mrb[0].mxu0 %v112
    %v396 = vpop.f32.mrb[0].mxu0
    %v397 = vadd.f32 %v75, %v396
    %v398 = vpop.f32.mrb[0].mxu0
    %v399 = vadd.f32 %v79, %v398
    %v400 = vpop.f32.mrb[0].mxu0
    %v401 = vpop.f32.mrb[0].mxu0
    %402 = vdwg.mxu0
    %v403 = vxor.u32 %v356, 2147483648
    %v404 = vmul.f32 %v403, 1.442695
    %v405 = vpow.pop %v404
    %v406 = vadd.f32 %v405, 1.0
    %v407 = vrcp.pop %v406
    %v408 = vmul.f32 1.0, %v407
    %v409 = vxor.u32 %v358, 2147483648
    %v410 = vmul.f32 %v409, 1.442695
    %v411 = vpow.pop %v410
    %v412 = vadd.f32 %v411, 1.0
    %v413 = vrcp.pop %v412
    %v414 = vmul.f32 1.0, %v413
    %v415 = vxor.u32 %v397, 2147483648
    %v416 = vmul.f32 %v415, 1.442695
    %v417 = vpow.pop %v416
    %v418 = vadd.f32 %v417, 1.0
    %v419 = vrcp.pop %v418
    %v420 = vmul.f32 1.0, %v419
    %v421 = vtanh.pop %v399
    %v422 = vmul.f32 %v408, %v109
    %v423 = vmul.f32 %v414, %v421
    %v424 = vadd.f32 %v422, %v423
    %v425 = vtanh.pop %v424
    %v426 = vmul.f32 %v425, %v420
    %v427 = vpack.c.bf16 %v426, %v426
    %v428 = vld [vmem:[#allocation7 + $0x40] sm:$0xf]
    %v429 = vld [vmem:[#allocation7 + $0x44] sm:$0xf]
    %v430 = vld [vmem:[#allocation7 + $0x48] sm:$0xf]
    %v431 = vld [vmem:[#allocation7 + $0x4c] sm:$0xf]
    %v432 = vld [vmem:[#allocation7 + $0x50] sm:$0xf]
    %v433 = vld [vmem:[#allocation7 + $0x54] sm:$0xf]
    %v434 = vld [vmem:[#allocation7 + $0x58] sm:$0xf]
    %v435 = vld [vmem:[#allocation7 + $0x5c] sm:$0xf]
    %v436 = vld [vmem:[#allocation7 + $0x60] sm:$0xf]
    %v437 = vld [vmem:[#allocation7 + $0x64] sm:$0xf]
    %v438 = vld [vmem:[#allocation7 + $0x68] sm:$0xf]
    %v439 = vld [vmem:[#allocation7 + $0x6c] sm:$0xf]
    %v440 = vld [vmem:[#allocation7 + $0x70] sm:$0xf]
    %v441 = vld [vmem:[#allocation7 + $0x74] sm:$0xf]
    %v442 = vld [vmem:[#allocation7 + $0x78] sm:$0xf]
    %v443 = vld [vmem:[#allocation7 + $0x7c] sm:$0xf]
    %v460 = vunpack.c.l.b16 %v428
    %v461 = vunpack.c.l.b16 %v429
    %v462 = vunpack.c.l.b16 %v430
    %v463 = vunpack.c.l.b16 %v431
    %v464 = vunpack.c.l.b16 %v432
    %v465 = vunpack.c.l.b16 %v433
    %v466 = vunpack.c.l.b16 %v434
    %v467 = vunpack.c.l.b16 %v435
    %v468 = vunpack.c.l.b16 %v436
    %v469 = vunpack.c.l.b16 %v437
    %v470 = vunpack.c.l.b16 %v438
    %v471 = vunpack.c.l.b16 %v439
    %v472 = vunpack.c.l.b16 %v440
    %v473 = vunpack.c.l.b16 %v441
    %v474 = vunpack.c.l.b16 %v442
    %v475 = vunpack.c.l.b16 %v443
    %v476 = vpack.c.b16 %v461, %v460
    %v477 = vpack.c.b16 %v463, %v462
    %v478 = vpack.c.b16 %v465, %v464
    %v479 = vpack.c.b16 %v467, %v466
    %v480 = vpack.c.b16 %v469, %v468
    %v481 = vpack.c.b16 %v471, %v470
    %v482 = vpack.c.b16 %v473, %v472
    %v483 = vpack.c.b16 %v475, %v474
    %492 = vmatprep.subr.bf16.mxu0 0
    %493 = vmatpush1.bf16.msra.mxu0 %v476
    %494 = vmatprep.subr.bf16.mxu0 0
    %495 = vmatpush1.bf16.msra.mxu0 %v477
    %496 = vmatprep.subr.bf16.mxu0 0
    %497 = vmatpush1.bf16.msra.mxu0 %v478
    %498 = vmatprep.subr.bf16.mxu0 0
    %499 = vmatpush1.bf16.msra.mxu0 %v479
    %500 = vmatprep.subr.bf16.mxu0 0
    %501 = vmatpush1.bf16.msra.mxu0 %v480
    %502 = vmatprep.subr.bf16.mxu0 0
    %503 = vmatpush1.bf16.msra.mxu0 %v481
    %504 = vmatprep.subr.bf16.mxu0 0
    %505 = vmatpush1.bf16.msra.mxu0 %v482
    %506 = vmatprep.subr.bf16.mxu0 0
    %507 = vmatpush1.bf16.msra.mxu0 %v483
    %508 = vmatprep.subr.bf16.mxu0 0
    %509 = vmatpush1.bf16.msra.mxu0 0
    %510 = vmatprep.subr.bf16.mxu0 0
    %511 = vmatpush1.bf16.msra.mxu0 0
    %512 = vmatprep.subr.bf16.mxu0 0
    %513 = vmatpush1.bf16.msra.mxu0 0
    %514 = vmatprep.subr.bf16.mxu0 0
    %515 = vmatpush1.bf16.msra.mxu0 0
    %516 = vmatprep.subr.bf16.mxu0 0
    %517 = vmatpush1.bf16.msra.mxu0 0
    %518 = vmatprep.subr.bf16.mxu0 0
    %519 = vmatpush1.bf16.msra.mxu0 0
    %520 = vmatprep.subr.bf16.mxu0 0
    %521 = vmatpush1.bf16.msra.mxu0 0
    %522 = vmatprep.subr.bf16.mxu0 0
    %523 = vmatpush1.bf16.msra.mxu0 0
    %524 = vmatprep.mubr.bf16.mxu0 0
    %525 = vmatmul.mubr.bf16.gmra.mrb[0].mxu0 %v427
    %v526 = vpop.f32.mrb[0].mxu0
    %v527 = vadd.f32 0.0, %v526
    %v528 = vpop.f32.mrb[0].mxu0
    %v529 = vpop.f32.mrb[0].mxu0
    %v530 = vpop.f32.mrb[0].mxu0
    %531 = vdwg.mxu0
    %v548 = vunpack.c.l.b16 %v113
    %v549 = vunpack.c.l.b16 %v114
    %v550 = vunpack.c.l.b16 %v115
    %v551 = vunpack.c.l.b16 %v116
    %v552 = vunpack.c.l.b16 %v117
    %v553 = vunpack.c.l.b16 %v118
    %v554 = vunpack.c.l.b16 %v119
    %v555 = vunpack.c.l.b16 %v120
    %v556 = vunpack.c.l.b16 %v121
    %v557 = vunpack.c.l.b16 %v122
    %v558 = vunpack.c.l.b16 %v123
    %v559 = vunpack.c.l.b16 %v124
    %v560 = vunpack.c.l.b16 %v125
    %v561 = vunpack.c.l.b16 %v126
    %v562 = vunpack.c.l.b16 %v127
    %v563 = vunpack.c.l.b16 %v128
    %v564 = vpack.c.b16 %v549, %v548
    %v565 = vpack.c.b16 %v551, %v550
    %v566 = vpack.c.b16 %v553, %v552
    %v567 = vpack.c.b16 %v555, %v554
    %v568 = vpack.c.b16 %v557, %v556
    %v569 = vpack.c.b16 %v559, %v558
    %v570 = vpack.c.b16 %v561, %v560
    %v571 = vpack.c.b16 %v563, %v562
    %580 = vmatprep.subr.bf16.mxu0 0
    %581 = vmatpush1.bf16.msra.mxu0 %v564
    %582 = vmatprep.subr.bf16.mxu0 0
    %583 = vmatpush1.bf16.msra.mxu0 %v565
    %584 = vmatprep.subr.bf16.mxu0 0
    %585 = vmatpush1.bf16.msra.mxu0 %v566
    %586 = vmatprep.subr.bf16.mxu0 0
    %587 = vmatpush1.bf16.msra.mxu0 %v567
    %588 = vmatprep.subr.bf16.mxu0 0
    %589 = vmatpush1.bf16.msra.mxu0 %v568
    %590 = vmatprep.subr.bf16.mxu0 0
    %591 = vmatpush1.bf16.msra.mxu0 %v569
    %592 = vmatprep.subr.bf16.mxu0 0
    %593 = vmatpush1.bf16.msra.mxu0 %v570
    %594 = vmatprep.subr.bf16.mxu0 0
    %595 = vmatpush1.bf16.msra.mxu0 %v571
    %596 = vmatprep.subr.bf16.mxu0 0
    %597 = vmatpush1.bf16.msra.mxu0 0
    %598 = vmatprep.subr.bf16.mxu0 0
    %599 = vmatpush1.bf16.msra.mxu0 0
    %600 = vmatprep.subr.bf16.mxu0 0
    %601 = vmatpush1.bf16.msra.mxu0 0
    %602 = vmatprep.subr.bf16.mxu0 0
    %603 = vmatpush1.bf16.msra.mxu0 0
    %604 = vmatprep.subr.bf16.mxu0 0
    %605 = vmatpush1.bf16.msra.mxu0 0
    %606 = vmatprep.subr.bf16.mxu0 0
    %607 = vmatpush1.bf16.msra.mxu0 0
    %608 = vmatprep.subr.bf16.mxu0 0
    %609 = vmatpush1.bf16.msra.mxu0 0
    %610 = vmatprep.subr.bf16.mxu0 0
    %611 = vmatpush1.bf16.msra.mxu0 0
    %612 = vmatprep.mubr.bf16.mxu0 0
    %613 = vmatmul.mubr.bf16.gmra.mrb[0].mxu0 %v112
    %v614 = vpop.f32.mrb[0].mxu0
    %v615 = vadd.f32 %v527, %v614
    %v616 = vpop.f32.mrb[0].mxu0
    %v617 = vpop.f32.mrb[0].mxu0
    %v618 = vpop.f32.mrb[0].mxu0
    %619 = vdwg.mxu0
    %620 = vmatprep.subr.bf16.mxu0 %v258
    %621 = vmatpush1.bf16.msra.mxu0 %v257
    %622 = vmatprep.subr.bf16.mxu0 %v262
    %623 = vmatpush1.bf16.msra.mxu0 %v261
    %624 = vmatprep.subr.bf16.mxu0 %v266
    %625 = vmatpush1.bf16.msra.mxu0 %v265
    %626 = vmatprep.subr.bf16.mxu0 %v270
    %627 = vmatpush1.bf16.msra.mxu0 %v269
    %628 = vmatprep.subr.bf16.mxu0 %v274
    %629 = vmatpush1.bf16.msra.mxu0 %v273
    %630 = vmatprep.subr.bf16.mxu0 %v278
    %631 = vmatpush1.bf16.msra.mxu0 %v277
    %632 = vmatprep.subr.bf16.mxu0 %v282
    %633 = vmatpush1.bf16.msra.mxu0 %v281
    %634 = vmatprep.subr.bf16.mxu0 %v286
    %635 = vmatpush1.bf16.msra.mxu0 %v285
    %636 = vmatprep.subr.bf16.mxu0 0
    %637 = vmatpush1.bf16.msra.mxu0 0
    %638 = vmatprep.subr.bf16.mxu0 0
    %639 = vmatpush1.bf16.msra.mxu0 0
    %640 = vmatprep.subr.bf16.mxu0 0
    %641 = vmatpush1.bf16.msra.mxu0 0
    %642 = vmatprep.subr.bf16.mxu0 0
    %643 = vmatpush1.bf16.msra.mxu0 0
    %644 = vmatprep.subr.bf16.mxu0 0
    %645 = vmatpush1.bf16.msra.mxu0 0
    %646 = vmatprep.subr.bf16.mxu0 0
    %647 = vmatpush1.bf16.msra.mxu0 0
    %648 = vmatprep.subr.bf16.mxu0 0
    %649 = vmatpush1.bf16.msra.mxu0 0
    %650 = vmatprep.subr.bf16.mxu0 0
    %651 = vmatpush1.bf16.msra.mxu0 0
    %652 = vmatprep.mubr.bf16.mxu0 0
    %653 = vmatmul.mubr.bf16.gmra.mrb[0].mxu0 %v427
    %v654 = vpop.f32.mrb[0].mxu0
    %v655 = vadd.f32 %v67, %v654
    %v656 = vpop.f32.mrb[0].mxu0
    %v657 = vadd.f32 %v71, %v656
    %v658 = vpop.f32.mrb[0].mxu0
    %v659 = vpop.f32.mrb[0].mxu0
    %660 = vdwg.mxu0
    %661 = vmatprep.subr.bf16.mxu0 %v260
    %662 = vmatpush1.bf16.msra.mxu0 %v259
    %663 = vmatprep.subr.bf16.mxu0 %v264
    %664 = vmatpush1.bf16.msra.mxu0 %v263
    %665 = vmatprep.subr.bf16.mxu0 %v268
    %666 = vmatpush1.bf16.msra.mxu0 %v267
    %667 = vmatprep.subr.bf16.mxu0 %v272
    %668 = vmatpush1.bf16.msra.mxu0 %v271
    %669 = vmatprep.subr.bf16.mxu0 %v276
    %670 = vmatpush1.bf16.msra.mxu0 %v275
    %671 = vmatprep.subr.bf16.mxu0 %v280
    %672 = vmatpush1.bf16.msra.mxu0 %v279
    %673 = vmatprep.subr.bf16.mxu0 %v284
    %674 = vmatpush1.bf16.msra.mxu0 %v283
    %675 = vmatprep.subr.bf16.mxu0 %v288
    %676 = vmatpush1.bf16.msra.mxu0 %v287
    %677 = vmatprep.subr.bf16.mxu0 0
    %678 = vmatpush1.bf16.msra.mxu0 0
    %679 = vmatprep.subr.bf16.mxu0 0
    %680 = vmatpush1.bf16.msra.mxu0 0
    %681 = vmatprep.subr.bf16.mxu0 0
    %682 = vmatpush1.bf16.msra.mxu0 0
    %683 = vmatprep.subr.bf16.mxu0 0
    %684 = vmatpush1.bf16.msra.mxu0 0
    %685 = vmatprep.subr.bf16.mxu0 0
    %686 = vmatpush1.bf16.msra.mxu0 0
    %687 = vmatprep.subr.bf16.mxu0 0
    %688 = vmatpush1.bf16.msra.mxu0 0
    %689 = vmatprep.subr.bf16.mxu0 0
    %690 = vmatpush1.bf16.msra.mxu0 0
    %691 = vmatprep.subr.bf16.mxu0 0
    %692 = vmatpush1.bf16.msra.mxu0 0
    %693 = vmatprep.mubr.bf16.mxu0 0
    %694 = vmatmul.mubr.bf16.gmra.mrb[0].mxu0 %v427
    %v695 = vpop.f32.mrb[0].mxu0
    %v696 = vadd.f32 %v75, %v695
    %v697 = vpop.f32.mrb[0].mxu0
    %v698 = vadd.f32 %v79, %v697
    %v699 = vpop.f32.mrb[0].mxu0
    %v700 = vpop.f32.mrb[0].mxu0
    %701 = vdwg.mxu0
    %v702 = vxor.u32 %v655, 2147483648
    %v703 = vmul.f32 %v702, 1.442695
    %v704 = vpow.pop %v703
    %v705 = vadd.f32 %v704, 1.0
    %v706 = vrcp.pop %v705
    %v707 = vmul.f32 1.0, %v706
    %v708 = vxor.u32 %v657, 2147483648
    %v709 = vmul.f32 %v708, 1.442695
    %v710 = vpow.pop %v709
    %v711 = vadd.f32 %v710, 1.0
    %v712 = vrcp.pop %v711
    %v713 = vmul.f32 1.0, %v712
    %v714 = vxor.u32 %v696, 2147483648
    %v715 = vmul.f32 %v714, 1.442695
    %v716 = vpow.pop %v715
    %v717 = vadd.f32 %v716, 1.0
    %v718 = vrcp.pop %v717
    %v719 = vmul.f32 1.0, %v718
    %v720 = vtanh.pop %v698
    %v721 = vmul.f32 %v707, %v424
    %v722 = vmul.f32 %v713, %v720
    %v723 = vadd.f32 %v721, %v722
    %v724 = vtanh.pop %v723
    %v725 = vmul.f32 %v724, %v719
    %v726 = vpack.c.bf16 %v725, %v725
    %v727 = vld [vmem:[#allocation7 + $0x80] sm:$0xf]
    %v728 = vld [vmem:[#allocation7 + $0x84] sm:$0xf]
    %v729 = vld [vmem:[#allocation7 + $0x88] sm:$0xf]
    %v730 = vld [vmem:[#allocation7 + $0x8c] sm:$0xf]
    %v731 = vld [vmem:[#allocation7 + $0x90] sm:$0xf]
    %v732 = vld [vmem:[#allocation7 + $0x94] sm:$0xf]
    %v733 = vld [vmem:[#allocation7 + $0x98] sm:$0xf]
    %v734 = vld [vmem:[#allocation7 + $0x9c] sm:$0xf]
    %v735 = vld [vmem:[#allocation7 + $0xa0] sm:$0xf]
    %v736 = vld [vmem:[#allocation7 + $0xa4] sm:$0xf]
    %v737 = vld [vmem:[#allocation7 + $0xa8] sm:$0xf]
    %v738 = vld [vmem:[#allocation7 + $0xac] sm:$0xf]
    %v739 = vld [vmem:[#allocation7 + $0xb0] sm:$0xf]
    %v740 = vld [vmem:[#allocation7 + $0xb4] sm:$0xf]
    %v741 = vld [vmem:[#allocation7 + $0xb8] sm:$0xf]
    %v742 = vld [vmem:[#allocation7 + $0xbc] sm:$0xf]
    %v759 = vunpack.c.l.b16 %v727
    %v760 = vunpack.c.l.b16 %v728
    %v761 = vunpack.c.l.b16 %v729
    %v762 = vunpack.c.l.b16 %v730
    %v763 = vunpack.c.l.b16 %v731
    %v764 = vunpack.c.l.b16 %v732
    %v765 = vunpack.c.l.b16 %v733
    %v766 = vunpack.c.l.b16 %v734
    %v767 = vunpack.c.l.b16 %v735
    %v768 = vunpack.c.l.b16 %v736
    %v769 = vunpack.c.l.b16 %v737
    %v770 = vunpack.c.l.b16 %v738
    %v771 = vunpack.c.l.b16 %v739
    %v772 = vunpack.c.l.b16 %v740
    %v773 = vunpack.c.l.b16 %v741
    %v774 = vunpack.c.l.b16 %v742
    %v775 = vpack.c.b16 %v760, %v759
    %v776 = vpack.c.b16 %v762, %v761
    %v777 = vpack.c.b16 %v764, %v763
    %v778 = vpack.c.b16 %v766, %v765
    %v779 = vpack.c.b16 %v768, %v767
    %v780 = vpack.c.b16 %v770, %v769
    %v781 = vpack.c.b16 %v772, %v771
    %v782 = vpack.c.b16 %v774, %v773
    %791 = vmatprep.subr.bf16.mxu0 0
    %792 = vmatpush1.bf16.msra.mxu0 %v775
    %793 = vmatprep.subr.bf16.mxu0 0
    %794 = vmatpush1.bf16.msra.mxu0 %v776
    %795 = vmatprep.subr.bf16.mxu0 0
    %796 = vmatpush1.bf16.msra.mxu0 %v777
    %797 = vmatprep.subr.bf16.mxu0 0
    %798 = vmatpush1.bf16.msra.mxu0 %v778
    %799 = vmatprep.subr.bf16.mxu0 0
    %800 = vmatpush1.bf16.msra.mxu0 %v779
    %801 = vmatprep.subr.bf16.mxu0 0
    %802 = vmatpush1.bf16.msra.mxu0 %v780
    %803 = vmatprep.subr.bf16.mxu0 0
    %804 = vmatpush1.bf16.msra.mxu0 %v781
    %805 = vmatprep.subr.bf16.mxu0 0
    %806 = vmatpush1.bf16.msra.mxu0 %v782
    %807 = vmatprep.subr.bf16.mxu0 0
    %808 = vmatpush1.bf16.msra.mxu0 0
    %809 = vmatprep.subr.bf16.mxu0 0
    %810 = vmatpush1.bf16.msra.mxu0 0
    %811 = vmatprep.subr.bf16.mxu0 0
    %812 = vmatpush1.bf16.msra.mxu0 0
    %813 = vmatprep.subr.bf16.mxu0 0
    %814 = vmatpush1.bf16.msra.mxu0 0
    %815 = vmatprep.subr.bf16.mxu0 0
    %816 = vmatpush1.bf16.msra.mxu0 0
    %817 = vmatprep.subr.bf16.mxu0 0
    %818 = vmatpush1.bf16.msra.mxu0 0
    %819 = vmatprep.subr.bf16.mxu0 0
    %820 = vmatpush1.bf16.msra.mxu0 0
    %821 = vmatprep.subr.bf16.mxu0 0
    %822 = vmatpush1.bf16.msra.mxu0 0
    %823 = vmatprep.mubr.bf16.mxu0 0
    %824 = vmatmul.mubr.bf16.gmra.mrb[0].mxu0 %v726
    %v825 = vpop.f32.mrb[0].mxu0
    %v826 = vadd.f32 0.0, %v825
    %v827 = vpop.f32.mrb[0].mxu0
    %v828 = vpop.f32.mrb[0].mxu0
    %v829 = vpop.f32.mrb[0].mxu0
    %830 = vdwg.mxu0
    %v831 = vadd.f32 %v615, %v826
    %832 = vmatprep.subr.bf16.mxu0 %v258
    %833 = vmatpush1.bf16.msra.mxu0 %v257
    %834 = vmatprep.subr.bf16.mxu0 %v262
    %835 = vmatpush1.bf16.msra.mxu0 %v261
    %836 = vmatprep.subr.bf16.mxu0 %v266
    %837 = vmatpush1.bf16.msra.mxu0 %v265
    %838 = vmatprep.subr.bf16.mxu0 %v270
    %839 = vmatpush1.bf16.msra.mxu0 %v269
    %840 = vmatprep.subr.bf16.mxu0 %v274
    %841 = vmatpush1.bf16.msra.mxu0 %v273
    %842 = vmatprep.subr.bf16.mxu0 %v278
    %843 = vmatpush1.bf16.msra.mxu0 %v277
    %844 = vmatprep.subr.bf16.mxu0 %v282
    %845 = vmatpush1.bf16.msra.mxu0 %v281
    %846 = vmatprep.subr.bf16.mxu0 %v286
    %847 = vmatpush1.bf16.msra.mxu0 %v285
    %848 = vmatprep.subr.bf16.mxu0 0
    %849 = vmatpush1.bf16.msra.mxu0 0
    %850 = vmatprep.subr.bf16.mxu0 0
    %851 = vmatpush1.bf16.msra.mxu0 0
    %852 = vmatprep.subr.bf16.mxu0 0
    %853 = vmatpush1.bf16.msra.mxu0 0
    %854 = vmatprep.subr.bf16.mxu0 0
    %855 = vmatpush1.bf16.msra.mxu0 0
    %856 = vmatprep.subr.bf16.mxu0 0
    %857 = vmatpush1.bf16.msra.mxu0 0
    %858 = vmatprep.subr.bf16.mxu0 0
    %859 = vmatpush1.bf16.msra.mxu0 0
    %860 = vmatprep.subr.bf16.mxu0 0
    %861 = vmatpush1.bf16.msra.mxu0 0
    %862 = vmatprep.subr.bf16.mxu0 0
    %863 = vmatpush1.bf16.msra.mxu0 0
    %864 = vmatprep.mubr.bf16.mxu0 0
    %865 = vmatmul.mubr.bf16.gmra.mrb[0].mxu0 %v726
    %v866 = vpop.f32.mrb[0].mxu0
    %v867 = vadd.f32 %v67, %v866
    %v868 = vpop.f32.mrb[0].mxu0
    %v869 = vadd.f32 %v71, %v868
    %v870 = vpop.f32.mrb[0].mxu0
    %v871 = vpop.f32.mrb[0].mxu0
    %872 = vdwg.mxu0
    %873 = vmatprep.subr.bf16.mxu0 %v260
    %874 = vmatpush1.bf16.msra.mxu0 %v259
    %875 = vmatprep.subr.bf16.mxu0 %v264
    %876 = vmatpush1.bf16.msra.mxu0 %v263
    %877 = vmatprep.subr.bf16.mxu0 %v268
    %878 = vmatpush1.bf16.msra.mxu0 %v267
    %879 = vmatprep.subr.bf16.mxu0 %v272
    %880 = vmatpush1.bf16.msra.mxu0 %v271
    %881 = vmatprep.subr.bf16.mxu0 %v276
    %882 = vmatpush1.bf16.msra.mxu0 %v275
    %883 = vmatprep.subr.bf16.mxu0 %v280
    %884 = vmatpush1.bf16.msra.mxu0 %v279
    %885 = vmatprep.subr.bf16.mxu0 %v284
    %886 = vmatpush1.bf16.msra.mxu0 %v283
    %887 = vmatprep.subr.bf16.mxu0 %v288
    %888 = vmatpush1.bf16.msra.mxu0 %v287
    %889 = vmatprep.subr.bf16.mxu0 0
    %890 = vmatpush1.bf16.msra.mxu0 0
    %891 = vmatprep.subr.bf16.mxu0 0
    %892 = vmatpush1.bf16.msra.mxu0 0
    %893 = vmatprep.subr.bf16.mxu0 0
    %894 = vmatpush1.bf16.msra.mxu0 0
    %895 = vmatprep.subr.bf16.mxu0 0
    %896 = vmatpush1.bf16.msra.mxu0 0
    %897 = vmatprep.subr.bf16.mxu0 0
    %898 = vmatpush1.bf16.msra.mxu0 0
    %899 = vmatprep.subr.bf16.mxu0 0
    %900 = vmatpush1.bf16.msra.mxu0 0
    %901 = vmatprep.subr.bf16.mxu0 0
    %902 = vmatpush1.bf16.msra.mxu0 0
    %903 = vmatprep.subr.bf16.mxu0 0
    %904 = vmatpush1.bf16.msra.mxu0 0
    %905 = vmatprep.mubr.bf16.mxu0 0
    %906 = vmatmul.mubr.bf16.gmra.mrb[0].mxu0 %v726
    %v907 = vpop.f32.mrb[0].mxu0
    %v908 = vadd.f32 %v75, %v907
    %v909 = vpop.f32.mrb[0].mxu0
    %v910 = vadd.f32 %v79, %v909
    %v911 = vpop.f32.mrb[0].mxu0
    %v912 = vpop.f32.mrb[0].mxu0
    %913 = vdwg.mxu0
    %v914 = vxor.u32 %v867, 2147483648
    %v915 = vmul.f32 %v914, 1.442695
    %v916 = vpow.pop %v915
    %v917 = vadd.f32 %v916, 1.0
    %v918 = vrcp.pop %v917
    %v919 = vmul.f32 1.0, %v918
    %v920 = vxor.u32 %v869, 2147483648
    %v921 = vmul.f32 %v920, 1.442695
    %v922 = vpow.pop %v921
    %v923 = vadd.f32 %v922, 1.0
    %v924 = vrcp.pop %v923
    %v925 = vmul.f32 1.0, %v924
    %v926 = vxor.u32 %v908, 2147483648
    %v927 = vmul.f32 %v926, 1.442695
    %v928 = vpow.pop %v927
    %v929 = vadd.f32 %v928, 1.0
    %v930 = vrcp.pop %v929
    %v931 = vmul.f32 1.0, %v930
    %v932 = vtanh.pop %v910
    %v933 = vmul.f32 %v919, %v723
    %v934 = vmul.f32 %v925, %v932
    %v935 = vadd.f32 %v933, %v934
    %v936 = vtanh.pop %v935
    %v937 = vmul.f32 %v936, %v931
    %v938 = vpack.c.bf16 %v937, %v937
    %v939 = vld [vmem:[#allocation7 + $0xc0] sm:$0xf]
    %v940 = vld [vmem:[#allocation7 + $0xc4] sm:$0xf]
    %v941 = vld [vmem:[#allocation7 + $0xc8] sm:$0xf]
    %v942 = vld [vmem:[#allocation7 + $0xcc] sm:$0xf]
    %v943 = vld [vmem:[#allocation7 + $0xd0] sm:$0xf]
    %v944 = vld [vmem:[#allocation7 + $0xd4] sm:$0xf]
    %v945 = vld [vmem:[#allocation7 + $0xd8] sm:$0xf]
    %v946 = vld [vmem:[#allocation7 + $0xdc] sm:$0xf]
    %v947 = vld [vmem:[#allocation7 + $0xe0] sm:$0xf]
    %v948 = vld [vmem:[#allocation7 + $0xe4] sm:$0xf]
    %v949 = vld [vmem:[#allocation7 + $0xe8] sm:$0xf]
    %v950 = vld [vmem:[#allocation7 + $0xec] sm:$0xf]
    %v951 = vld [vmem:[#allocation7 + $0xf0] sm:$0xf]
    %v952 = vld [vmem:[#allocation7 + $0xf4] sm:$0xf]
    %v953 = vld [vmem:[#allocation7 + $0xf8] sm:$0xf]
    %v954 = vld [vmem:[#allocation7 + $0xfc] sm:$0xf]
    %v971 = vunpack.c.l.b16 %v939
    %v972 = vunpack.c.l.b16 %v940
    %v973 = vunpack.c.l.b16 %v941
    %v974 = vunpack.c.l.b16 %v942
    %v975 = vunpack.c.l.b16 %v943
    %v976 = vunpack.c.l.b16 %v944
    %v977 = vunpack.c.l.b16 %v945
    %v978 = vunpack.c.l.b16 %v946
    %v979 = vunpack.c.l.b16 %v947
    %v980 = vunpack.c.l.b16 %v948
    %v981 = vunpack.c.l.b16 %v949
    %v982 = vunpack.c.l.b16 %v950
    %v983 = vunpack.c.l.b16 %v951
    %v984 = vunpack.c.l.b16 %v952
    %v985 = vunpack.c.l.b16 %v953
    %v986 = vunpack.c.l.b16 %v954
    %v987 = vpack.c.b16 %v972, %v971
    %v988 = vpack.c.b16 %v974, %v973
    %v989 = vpack.c.b16 %v976, %v975
    %v990 = vpack.c.b16 %v978, %v977
    %v991 = vpack.c.b16 %v980, %v979
    %v992 = vpack.c.b16 %v982, %v981
    %v993 = vpack.c.b16 %v984, %v983
    %v994 = vpack.c.b16 %v986, %v985
    %1003 = vmatprep.subr.bf16.mxu0 0
    %1004 = vmatpush1.bf16.msra.mxu0 %v987
    %1005 = vmatprep.subr.bf16.mxu0 0
    %1006 = vmatpush1.bf16.msra.mxu0 %v988
    %1007 = vmatprep.subr.bf16.mxu0 0
    %1008 = vmatpush1.bf16.msra.mxu0 %v989
    %1009 = vmatprep.subr.bf16.mxu0 0
    %1010 = vmatpush1.bf16.msra.mxu0 %v990
    %1011 = vmatprep.subr.bf16.mxu0 0
    %1012 = vmatpush1.bf16.msra.mxu0 %v991
    %1013 = vmatprep.subr.bf16.mxu0 0
    %1014 = vmatpush1.bf16.msra.mxu0 %v992
    %1015 = vmatprep.subr.bf16.mxu0 0
    %1016 = vmatpush1.bf16.msra.mxu0 %v993
    %1017 = vmatprep.subr.bf16.mxu0 0
    %1018 = vmatpush1.bf16.msra.mxu0 %v994
    %1019 = vmatprep.subr.bf16.mxu0 0
    %1020 = vmatpush1.bf16.msra.mxu0 0
    %1021 = vmatprep.subr.bf16.mxu0 0
    %1022 = vmatpush1.bf16.msra.mxu0 0
    %1023 = vmatprep.subr.bf16.mxu0 0
    %1024 = vmatpush1.bf16.msra.mxu0 0
    %1025 = vmatprep.subr.bf16.mxu0 0
    %1026 = vmatpush1.bf16.msra.mxu0 0
    %1027 = vmatprep.subr.bf16.mxu0 0
    %1028 = vmatpush1.bf16.msra.mxu0 0
    %1029 = vmatprep.subr.bf16.mxu0 0
    %1030 = vmatpush1.bf16.msra.mxu0 0
    %1031 = vmatprep.subr.bf16.mxu0 0
    %1032 = vmatpush1.bf16.msra.mxu0 0
    %1033 = vmatprep.subr.bf16.mxu0 0
    %1034 = vmatpush1.bf16.msra.mxu0 0
    %1035 = vmatprep.mubr.bf16.mxu0 0
    %1036 = vmatmul.mubr.bf16.gmra.mrb[0].mxu0 %v938
    %v1037 = vpop.f32.mrb[0].mxu0
    %v1038 = vadd.f32 0.0, %v1037
    %v1039 = vpop.f32.mrb[0].mxu0
    %v1040 = vpop.f32.mrb[0].mxu0
    %v1041 = vpop.f32.mrb[0].mxu0
    %1042 = vdwg.mxu0
    %v1043 = vadd.f32 %v831, %v1038
    %v1044 = vld [vmem:[%s4] sm:$0x1]
    %v1046 = vlaneseq
    %v1047 = vshrl.u32 %v1046, 7
    %v1048 = vsub.s32 0, %v1047
    %v1049 = vrot.slane %v1044, %v1048
    %v1051 = vadd.f32 %v1043, %v1049
    %1052 = vst [vmem:[#allocation8] sm:$0xff] %v1051
    // Predicated region
    $region34: #{tpu_custom_call.1} parent=1 // pred_check
      _
    $region35: #{tpu_custom_call.1} parent=1 // pred_check_branch
      %1054 = sbr.rel (0) target = $region37
    $region36: #{tpu_custom_call.1} parent=1 // pred_region
      %s1056 = ssub.s32 128, 128
      %1057 = vsyncadd [#allocation4], %s1056
      %s1059 = sshll.u32 [#allocation8], 4
      %s1060 = int_to_ptr.vmem [resolvable:$true] %s1059
      %1062 = dma.vmem_to_hbm [thread:$0]  %s1060, 128, %s5, [#allocation4]
    $region37: #{tpu_custom_call.1} parent=1 // pred_fallthru
      _
    // Predicated region
    $region38: #{tpu_custom_call.1} parent=1 // pred_check
      _
    $region39: #{tpu_custom_call.1} parent=1 // pred_check_branch
      %1064 = sbr.rel (0) target = $region41
    $region40: #{tpu_custom_call.1} parent=1 // pred_region
      %1065 = dma.done [#allocation4], 128
    $region41: #{tpu_custom_call.1} parent=1 // pred_fallthru
      _
    %1066 = vsyncpa [#allocation3], 1
    %1067 = vsyncpa [#allocation6], 1
    %1068 = vsyncpa [#allocation4], 1

</llo_original>
